<compile_context>
chip_gen: v7x
topology: tpu7x:2x2x1
jax: 0.10.0
libtpu: 0.0.40
codegen_flags: <defaults>
</compile_context>

<pallas_src>
import functools
import math

import jax
import jax.numpy as jnp
from jax.experimental import pallas as pl
from jax.experimental.pallas import tpu as pltpu


def _round_up(v, m):
    return (v + m - 1) // m * m


def _cdiv(a, b):
    return (a + b - 1) // b


def _pick_tile(dim, target, align):
    """Largest tile <= target that is a multiple of `align` and minimizes padding.

    Returns (tile, padded_dim) with padded_dim % tile == 0.
    """
    dim_p = _round_up(max(dim, 1), align)
    if dim_p <= target:
        return dim_p, dim_p
    n_tiles = _cdiv(dim_p, target)
    tile = _round_up(_cdiv(dim_p, n_tiles), align)
    return tile, _round_up(dim_p, tile)


def _tile_targets():
    """Generation-tuned (tm, tn, tk) targets (see perf review)."""
    try:
        kind = jax.devices()[0].device_kind.lower()
    except Exception:  # pragma: no cover - defensive
        kind = ""
    if "v5" in kind:          # v5e: AI knee ~240 -> 512x512 is comfortably MXU-bound
        return 512, 512, 1024
    return 1024, 1024, 1024   # v6e / v7x: ~20 MiB tile budget, well under VMEM limits


# ---------------------------------------------------------------------------
# Kernel: one (tm, tn) tile of  y = x @ Wt + b, accumulated over the K grid axis.
#   x_ref: (tm, tk) bf16      w_ref: (tk, tn) bf16  (weight already transposed)
#   b_ref: (1, tn)  f32       o_ref: (tm, tn) out dtype
#   acc_ref: (tm, tn) f32 VMEM scratch, persistent across the K axis.
# ---------------------------------------------------------------------------
def _linear_kernel(x_ref, w_ref, b_ref, o_ref, acc_ref):
    k = pl.program_id(2)

    partial = jnp.dot(x_ref[...], w_ref[...], preferred_element_type=jnp.float32)

    @pl.when(k == 0)
    def _():
        acc_ref[...] = partial            # direct write, no zero-init pass

    @pl.when(k > 0)
    def _():
        acc_ref[...] += partial

    @pl.when(k == pl.num_programs(2) - 1)
    def _():
        o_ref[...] = (acc_ref[...] + b_ref[...]).astype(o_ref.dtype)


def _linear_pallas(x2d, wt_p, b2d_p, *, tm, tn, tk, out_dtype):
    """x2d: (m_p, k_p) bf16 padded; wt_p: (k_p, n_p) bf16; b2d_p: (1, n_p) f32."""
    m_p, k_p = x2d.shape
    _, n_p = wt_p.shape
    gm, gn, gk = m_p // tm, n_p // tn, k_p // tk
    out_isize = jnp.dtype(out_dtype).itemsize

    # Explicit scoped-VMEM budget: double-buffered bf16 inputs + double-buffered
    # output + f32 accumulator (+50% headroom), capped below v7x's 64 MiB/TC.
    budget = (
        2 * (tm * tk + tk * tn) * 2     # x, W double-buffered (bf16)
        + 2 * tm * tn * out_isize       # output double buffer
        + tm * tn * 4                   # f32 accumulator scratch
        + 2 * tn * 4                    # bias
    )
    vmem_limit = int(min(48 << 20, max(32 << 20, budget + budget // 2)))

    flops = 2 * m_p * n_p * k_p
    # Real HBM traffic including re-fetches: x read gn times, W read gm times.
    bytes_accessed = (
        gn * m_p * k_p * 2
        + gm * n_p * k_p * 2
        + gm * n_p * 4
        + m_p * n_p * out_isize
    )

    return pl.pallas_call(
        _linear_kernel,
        out_shape=jax.ShapeDtypeStruct((m_p, n_p), out_dtype),
        grid=(gm, gn, gk),
        in_specs=[
            pl.BlockSpec((tm, tk), lambda i, j, kk: (i, kk)),   # x tile
            pl.BlockSpec((tk, tn), lambda i, j, kk: (kk, j)),   # W (K, N) tile
            pl.BlockSpec((1, tn), lambda i, j, kk: (0, j)),     # bias tile
        ],
        out_specs=pl.BlockSpec((tm, tn), lambda i, j, kk: (i, j)),
        scratch_shapes=[pltpu.VMEM((tm, tn), jnp.float32)],
        compiler_params=pltpu.CompilerParams(
            dimension_semantics=("parallel", "parallel", "arbitrary"),
            vmem_limit_bytes=vmem_limit,
        ),
        cost_estimate=pl.CostEstimate(
            flops=flops, transcendentals=0, bytes_accessed=bytes_accessed
        ),
    )(x2d, wt_p, b2d_p)


@functools.partial(
    jax.jit, static_argnames=("n", "k", "tn", "tk", "tm_target", "out_dtype")
)
def _forward_impl(x, wt_p, b2d_p, *, n, k, tn, tk, tm_target, out_dtype):
    b, s, d_in = x.shape
    assert d_in == k, (d_in, k)
    m = b * s
    k_p, n_p = wt_p.shape

    # Adaptive M tile: no padding of ragged M up to a fixed 512/1024 tile.
    tm, m_p = _pick_tile(m, tm_target, 8)

    # v7x megacore: if one big tile swallows a large problem, split M so both
    # TensorCores get a "parallel" block (irrelevant for tiny shapes).
    if m_p // tm == 1 and n_p // tn == 1 and m_p >= 256:
        tm, m_p = _pick_tile(m, max(8, (tm + 1) // 2), 8)

    # Cast + pad x in one shot (bf16 for the MXU; zero K padding is a no-op
    # in the dot, padded M rows are sliced off below).
    x2d = jnp.pad(
        x.reshape(m, d_in).astype(jnp.bfloat16),
        ((0, m_p - m), (0, k_p - d_in)),
    )

    out = _linear_pallas(x2d, wt_p, b2d_p, tm=tm, tn=tn, tk=tk, out_dtype=out_dtype)
    return out[:m, :n].reshape(b, s, n)


def make_base_model_forward(weight, bias, *, tm_target=None, tn_target=None,
                            tk_target=None, out_dtype=jnp.float32):
    """Build a forward(x) closure for y = x @ weight.T + bias.

    weight: (N, K) f32 — PyTorch nn.Linear layout.  Weight preprocessing
    (transpose to (K, N), bf16 cast, lane/tile padding) happens ONCE here and
    the result is cached as a device array, off the per-call path.
    """
    dm, dn, dk = _tile_targets()
    tm_target = tm_target or dm
    tn_target = tn_target or dn
    tk_target = tk_target or dk

    n, k = weight.shape
    tn, n_p = _pick_tile(n, tn_target, 128)
    tk, k_p = _pick_tile(k, tk_target, 128)

    # One-time weight prep: (N, K) f32 -> (K, N) bf16, padded to (k_p, n_p).
    wt_p = jnp.pad(
        jnp.asarray(weight).T.astype(jnp.bfloat16),
        ((0, k_p - k), (0, n_p - n)),
    )
    b2d_p = jnp.pad(
        jnp.asarray(bias).astype(jnp.float32).reshape(1, n),
        ((0, 0), (0, n_p - n)),
    )
    wt_p = jax.device_put(wt_p)
    b2d_p = jax.device_put(b2d_p)

    def forward(x):
        return _forward_impl(
            x, wt_p, b2d_p,
            n=n, k=k, tn=tn, tk=tk, tm_target=tm_target, out_dtype=out_dtype,
        )

    return forward


def init_params(key, hidden):
    """Matches BaseModel._initialize_weights for nn.Linear:
    kaiming_normal_(weight) (fan_in, gain=sqrt(2)), constant_(bias, 0)."""
    std = math.sqrt(2.0 / hidden)
    weight = std * jax.random.normal(key, (hidden, hidden), dtype=jnp.float32)
    bias = jnp.zeros((hidden,), dtype=jnp.float32)
    return weight, bias


if __name__ == "__main__":
    key = jax.random.PRNGKey(0)
    k_x, k_w = jax.random.split(key)

    batch, seq, hidden = 2, 8, 32
    x = jax.random.normal(k_x, (batch, seq, hidden), dtype=jnp.float32)
    weight, bias = init_params(k_w, hidden)

    forward = make_base_model_forward(weight, bias)
    y = jax.block_until_ready(forward(x))

    # Reference with the same bf16 input rounding (accumulation stays f32).
    xb = x.astype(jnp.bfloat16).astype(jnp.float32)
    wb = weight.astype(jnp.bfloat16).astype(jnp.float32)
    y_ref = (xb.reshape(-1, hidden) @ wb.T + bias).reshape(batch, seq, hidden)

    assert y.shape == (batch, seq, hidden)
    assert jnp.allclose(y, y_ref, atol=1e-3, rtol=1e-3), (
        float(jnp.max(jnp.abs(y - y_ref)))
    )

    print("KERNEL_OK")
</pallas_src>

<mosaic_0001>
module attributes {stable_mosaic.version = 11 : i64} {
  func.func @_linear_kernel(%arg0: i32, %arg1: i32, %arg2: i32, %arg3: memref<16x128xbf16, #tpu.memory_space<vmem>>, %arg4: memref<128x128xbf16, #tpu.memory_space<vmem>>, %arg5: memref<1x128xf32, #tpu.memory_space<vmem>>, %arg6: memref<16x128xf32, #tpu.memory_space<vmem>>, %arg7: memref<16x128xf32, #tpu.memory_space<vmem>>) attributes {dimension_semantics = [#tpu.dimension_semantics<parallel>, #tpu.dimension_semantics<parallel>, #tpu.dimension_semantics<arbitrary>], iteration_bounds = array<i64: 1, 1, 1>, scalar_prefetch = 0 : i64, scratch_operands = 1 : i64, tpu.core_type = #tpu.core_type<tc>, window_params = [{transform_indices = @transform_0, window_bounds = array<i64: 16, 128>}, {transform_indices = @transform_1, window_bounds = array<i64: 128, 128>}, {transform_indices = @transform_2, window_bounds = array<i64: 1, 128>}, {transform_indices = @transform_3, window_bounds = array<i64: 16, 128>}]} {
    %c0 = arith.constant 0 : index
    %c0_0 = arith.constant 0 : index
    %0 = vector.load %arg3[%c0, %c0_0] : memref<16x128xbf16, #tpu.memory_space<vmem>>, vector<16x128xbf16>
    %c0_1 = arith.constant 0 : index
    %c0_2 = arith.constant 0 : index
    %1 = vector.load %arg4[%c0_1, %c0_2] : memref<128x128xbf16, #tpu.memory_space<vmem>>, vector<128x128xbf16>
    %cst = arith.constant dense<0.000000e+00> : vector<16x128xf32>
    %2 = tpu.matmul %0, %1, %cst {dimension_numbers = #tpu.dot_dimension_numbers<[1], [0], [0], [1], [0, 0, 1, 1], [], []>} : vector<16x128xbf16>, vector<128x128xbf16>, vector<16x128xf32> -> vector<16x128xf32>
    %c0_i32 = arith.constant 0 : i32
    %3 = arith.cmpi eq, %arg2, %c0_i32 : i32
    %4 = arith.extui %3 : i1 to i32
    %c0_i32_3 = arith.constant 0 : i32
    %5 = arith.cmpi ne, %4, %c0_i32_3 : i32
    scf.if %5 {
      %c0_8 = arith.constant 0 : index
      %c0_9 = arith.constant 0 : index
      %12 = vector.load %arg7[%c0_8, %c0_9] : memref<16x128xf32, #tpu.memory_space<vmem>>, vector<16x128xf32>
      tpu.vector_store %arg7[%c0_8, %c0_9], %2 {strides = array<i32>} : memref<16x128xf32, #tpu.memory_space<vmem>>, vector<16x128xf32>,
    } else {
    }
    %c0_i32_4 = arith.constant 0 : i32
    %6 = arith.cmpi sgt, %arg2, %c0_i32_4 : i32
    %7 = arith.extui %6 : i1 to i32
    %c0_i32_5 = arith.constant 0 : i32
    %8 = arith.cmpi ne, %7, %c0_i32_5 : i32
    scf.if %8 {
      %c0_8 = arith.constant 0 : index
      %c0_9 = arith.constant 0 : index
      %12 = vector.load %arg7[%c0_8, %c0_9] : memref<16x128xf32, #tpu.memory_space<vmem>>, vector<16x128xf32>
      %13 = arith.addf %12, %2 : vector<16x128xf32>
      %c0_10 = arith.constant 0 : index
      %c0_11 = arith.constant 0 : index
      %14 = vector.load %arg7[%c0_10, %c0_11] : memref<16x128xf32, #tpu.memory_space<vmem>>, vector<16x128xf32>
      tpu.vector_store %arg7[%c0_10, %c0_11], %13 {strides = array<i32>} : memref<16x128xf32, #tpu.memory_space<vmem>>, vector<16x128xf32>,
    } else {
    }
    %c0_i32_6 = arith.constant 0 : i32
    %9 = arith.cmpi eq, %arg2, %c0_i32_6 : i32
    %10 = arith.extui %9 : i1 to i32
    %c0_i32_7 = arith.constant 0 : i32
    %11 = arith.cmpi ne, %10, %c0_i32_7 : i32
    scf.if %11 {
      %c0_8 = arith.constant 0 : index
      %c0_9 = arith.constant 0 : index
      %12 = vector.load %arg7[%c0_8, %c0_9] : memref<16x128xf32, #tpu.memory_space<vmem>>, vector<16x128xf32>
      %c0_10 = arith.constant 0 : index
      %c0_11 = arith.constant 0 : index
      %13 = vector.load %arg5[%c0_10, %c0_11] : memref<1x128xf32, #tpu.memory_space<vmem>>, vector<1x128xf32>
      %14 = vector.broadcast %13 : vector<1x128xf32> to vector<16x128xf32>
      %15 = arith.addf %12, %14 : vector<16x128xf32>
      %c0_12 = arith.constant 0 : index
      %c0_13 = arith.constant 0 : index
      %16 = vector.load %arg6[%c0_12, %c0_13] : memref<16x128xf32, #tpu.memory_space<vmem>>, vector<16x128xf32>
      tpu.vector_store %arg6[%c0_12, %c0_13], %15 {strides = array<i32>} : memref<16x128xf32, #tpu.memory_space<vmem>>, vector<16x128xf32>,
    } else {
    }
    return
  }
  func.func @transform_0(%arg0: i32, %arg1: i32, %arg2: i32) -> (i32, i32) {
    %c0_i32 = arith.constant 0 : i32
    return %arg0, %arg2 : i32, i32
  }
  func.func @transform_1(%arg0: i32, %arg1: i32, %arg2: i32) -> (i32, i32) {
    %c0_i32 = arith.constant 0 : i32
    return %arg2, %arg1 : i32, i32
  }
  func.func @transform_2(%arg0: i32, %arg1: i32, %arg2: i32) -> (i32, i32) {
    %c0_i32 = arith.constant 0 : i32
    %c0_i32_0 = arith.constant 0 : i32
    return %c0_i32, %arg1 : i32, i32
  }
  func.func @transform_3(%arg0: i32, %arg1: i32, %arg2: i32) -> (i32, i32) {
    %c0_i32 = arith.constant 0 : i32
    return %arg0, %arg1 : i32, i32
  }
}

</mosaic_0001>

<llo_original>
// kernel: _forward_impl.1
$region0: #{_forward_impl.1}
  #allocation0 [shape = 'u32[]', space=smem, size = 0x4, offset = 0x4, fixed_abs, tag = 'smem constant byte address 0x4 - core index']
  #allocation1 [shape = 'u32[144,128]{1,0:T(1,128)}', space=vmem, size = 0x12000, scoped, tag = 'internal scratch']
  #allocation2 [shape = 'f32[16,128]{1,0:T(8,128)}', space=vmem, size = 0x2000, scoped, tag = 'scratch operand']
  %s0 = inlined_call_operand.vmem [shape: bf16[16,128], index: 0, kind: input, shape index: {}]
  %s1 = inlined_call_operand.hbm [shape: bf16[128,128], index: 1, kind: input, shape index: {}]
  %s2 = inlined_call_operand.vmem [shape: f32[1,128], index: 2, kind: input, shape index: {}]
  %s3 = inlined_call_operand.vmem [shape: f32[16,128], index: 3, kind: output, shape index: {}]
  %s4 = sld [smem:[#allocation0]]
  $region38: #{_forward_impl.1} parent=0
    _
  %s6 = ssub.s32 1, %s4
  %s7 = scalar_select 0, %s6, %s4
  $region1: #{_forward_impl.1} parent=0
    #allocation3 [shape = 'u8[32768]{0}', space=vmem, size = 0x8000, scoped, tag = 'input window, operand 1, single buffered']
    #allocation4 [shape = 's32[1]{0}', space=sflag, size = 0x4, scoped, tag = 'scoped memory for _forward_impl.1']
    %8 = vsyncpa [#allocation4], 0
    // Predicated region
    $region2: #{_forward_impl.1} parent=1 // pred_check
      _
    $region3: #{_forward_impl.1} parent=1 // pred_check_branch
      %10 = sbr.rel (0) target = $region5
    $region4: #{_forward_impl.1} parent=1 // pred_region
      _
    $region5: #{_forward_impl.1} parent=1 // pred_fallthru
      _
    // Predicated region
    $region6: #{_forward_impl.1} parent=1 // pred_check
      _
    $region7: #{_forward_impl.1} parent=1 // pred_check_branch
      %12 = sbr.rel (0) target = $region9
    $region8: #{_forward_impl.1} parent=1 // pred_region
      %s14 = ssub.s32 1024, 1024
      %15 = vsyncadd [#allocation4], %s14
      %s16 = sshll.u32 [#allocation3], 4
      %s17 = int_to_ptr.vmem [resolvable:$true] %s16
      %22 = dma.hbm_to_vmem [thread:$0]  %s1, 1024, %s17, [#allocation4], 64, 64, 4
    $region9: #{_forward_impl.1} parent=1 // pred_fallthru
      _
    // Predicated region
    $region10: #{_forward_impl.1} parent=1 // pred_check
      _
    $region11: #{_forward_impl.1} parent=1 // pred_check_branch
      %24 = sbr.rel (0) target = $region13
    $region12: #{_forward_impl.1} parent=1 // pred_region
      _
    $region13: #{_forward_impl.1} parent=1 // pred_fallthru
      _
    // Predicated region
    $region14: #{_forward_impl.1} parent=1 // pred_check
      _
    $region15: #{_forward_impl.1} parent=1 // pred_check_branch
      %26 = sbr.rel (0) target = $region17
    $region16: #{_forward_impl.1} parent=1 // pred_region
      %27 = dma.done [#allocation4], 1024
    $region17: #{_forward_impl.1} parent=1 // pred_fallthru
      _
    %v29 = vld [vmem:[%s0] sm:$0xf]
    %v30 = vld [vmem:[%s0 + $0x4] sm:$0xf]
    %v31 = vld [vmem:[#allocation3] sm:$0xf]
    %v32 = vld [vmem:[#allocation3 + $0x4] sm:$0xf]
    %v33 = vld [vmem:[#allocation3 + $0x8] sm:$0xf]
    %v34 = vld [vmem:[#allocation3 + $0xc] sm:$0xf]
    %v35 = vld [vmem:[#allocation3 + $0x10] sm:$0xf]
    %v36 = vld [vmem:[#allocation3 + $0x14] sm:$0xf]
    %v37 = vld [vmem:[#allocation3 + $0x18] sm:$0xf]
    %v38 = vld [vmem:[#allocation3 + $0x1c] sm:$0xf]
    %v39 = vld [vmem:[#allocation3 + $0x20] sm:$0xf]
    %v40 = vld [vmem:[#allocation3 + $0x24] sm:$0xf]
    %v41 = vld [vmem:[#allocation3 + $0x28] sm:$0xf]
    %v42 = vld [vmem:[#allocation3 + $0x2c] sm:$0xf]
    %v43 = vld [vmem:[#allocation3 + $0x30] sm:$0xf]
    %v44 = vld [vmem:[#allocation3 + $0x34] sm:$0xf]
    %v45 = vld [vmem:[#allocation3 + $0x38] sm:$0xf]
    %v46 = vld [vmem:[#allocation3 + $0x3c] sm:$0xf]
    %v49 = vunpack.c.l.b16 %v29
    %v50 = vunpack.c.l.b16 %v30
    %v51 = vpack.c.b16 %v50, %v49
    %v69 = vunpack.c.l.b16 %v31
    %v70 = vunpack.c.l.b16 %v32
    %v71 = vunpack.c.l.b16 %v33
    %v72 = vunpack.c.l.b16 %v34
    %v73 = vunpack.c.l.b16 %v35
    %v74 = vunpack.c.l.b16 %v36
    %v75 = vunpack.c.l.b16 %v37
    %v76 = vunpack.c.l.b16 %v38
    %v77 = vunpack.c.l.b16 %v39
    %v78 = vunpack.c.l.b16 %v40
    %v79 = vunpack.c.l.b16 %v41
    %v80 = vunpack.c.l.b16 %v42
    %v81 = vunpack.c.l.b16 %v43
    %v82 = vunpack.c.l.b16 %v44
    %v83 = vunpack.c.l.b16 %v45
    %v84 = vunpack.c.l.b16 %v46
    %v85 = vpack.c.b16 %v70, %v69
    %v86 = vpack.c.b16 %v72, %v71
    %v87 = vpack.c.b16 %v74, %v73
    %v88 = vpack.c.b16 %v76, %v75
    %v89 = vpack.c.b16 %v78, %v77
    %v90 = vpack.c.b16 %v80, %v79
    %v91 = vpack.c.b16 %v82, %v81
    %v92 = vpack.c.b16 %v84, %v83
    %101 = vmatprep.subr.bf16.mxu0 0
    %102 = vmatpush1.bf16.msra.mxu0 %v85
    %103 = vmatprep.subr.bf16.mxu0 0
    %104 = vmatpush1.bf16.msra.mxu0 %v86
    %105 = vmatprep.subr.bf16.mxu0 0
    %106 = vmatpush1.bf16.msra.mxu0 %v87
    %107 = vmatprep.subr.bf16.mxu0 0
    %108 = vmatpush1.bf16.msra.mxu0 %v88
    %109 = vmatprep.subr.bf16.mxu0 0
    %110 = vmatpush1.bf16.msra.mxu0 %v89
    %111 = vmatprep.subr.bf16.mxu0 0
    %112 = vmatpush1.bf16.msra.mxu0 %v90
    %113 = vmatprep.subr.bf16.mxu0 0
    %114 = vmatpush1.bf16.msra.mxu0 %v91
    %115 = vmatprep.subr.bf16.mxu0 0
    %116 = vmatpush1.bf16.msra.mxu0 %v92
    %117 = vmatprep.subr.bf16.mxu0 0
    %118 = vmatpush1.bf16.msra.mxu0 0
    %119 = vmatprep.subr.bf16.mxu0 0
    %120 = vmatpush1.bf16.msra.mxu0 0
    %121 = vmatprep.subr.bf16.mxu0 0
    %122 = vmatpush1.bf16.msra.mxu0 0
    %123 = vmatprep.subr.bf16.mxu0 0
    %124 = vmatpush1.bf16.msra.mxu0 0
    %125 = vmatprep.subr.bf16.mxu0 0
    %126 = vmatpush1.bf16.msra.mxu0 0
    %127 = vmatprep.subr.bf16.mxu0 0
    %128 = vmatpush1.bf16.msra.mxu0 0
    %129 = vmatprep.subr.bf16.mxu0 0
    %130 = vmatpush1.bf16.msra.mxu0 0
    %131 = vmatprep.subr.bf16.mxu0 0
    %132 = vmatpush1.bf16.msra.mxu0 0
    %133 = vmatprep.mubr.bf16.mxu0 0
    %134 = vmatmul.mubr.bf16.gmra.mrb[0].mxu0 %v51
    %v135 = vpop.f32.mrb[0].mxu0
    %v136 = vadd.f32 0.0, %v135
    %v137 = vpop.f32.mrb[0].mxu0
    %v138 = vpop.f32.mrb[0].mxu0
    %v139 = vadd.f32 0.0, %v138
    %v140 = vpop.f32.mrb[0].mxu0
    %141 = vdwg.mxu0
    %p142 = scmp.eq.s32.totalorder 0, 0
    // Predicated region
    $region18: #{_forward_impl.1} parent=1 // pred_check
      %p143 = pneg %p142
    $region19: #{_forward_impl.1} parent=1 // pred_check_branch
      %145 = sbr.rel (%p143) target = $region21
    $region20: #{_forward_impl.1} parent=1 // pred_region
      %146 = vst [vmem:[#allocation2] sm:$0xff] %v136
      %147 = vst [vmem:[#allocation2 + $0x8] sm:$0xff] %v139
    $region21: #{_forward_impl.1} parent=1 // pred_fallthru
      _
    %p148 = scmp.gt.s32.totalorder 0, 0
    // Predicated region
    $region22: #{_forward_impl.1} parent=1 // pred_check
      %p149 = pneg %p148
    $region23: #{_forward_impl.1} parent=1 // pred_check_branch
      %151 = sbr.rel (%p149) target = $region25
    $region24: #{_forward_impl.1} parent=1 // pred_region
      %v152 = vld [vmem:[#allocation2] sm:$0xff]
      %v153 = vld [vmem:[#allocation2 + $0x8] sm:$0xff]
      %v154 = vadd.f32 %v152, %v136
      %v155 = vadd.f32 %v153, %v139
      %156 = vst [vmem:[#allocation2] sm:$0xff] %v154
      %157 = vst [vmem:[#allocation2 + $0x8] sm:$0xff] %v155
    $region25: #{_forward_impl.1} parent=1 // pred_fallthru
      _
    // Predicated region
    $region26: #{_forward_impl.1} parent=1 // pred_check
      %p158 = pneg %p142
    $region27: #{_forward_impl.1} parent=1 // pred_check_branch
      %160 = sbr.rel (%p158) target = $region29
    $region28: #{_forward_impl.1} parent=1 // pred_region
      %v161 = vld [vmem:[#allocation2] sm:$0xff]
      %v162 = vld [vmem:[#allocation2 + $0x8] sm:$0xff]
      %v163 = vld [vmem:[%s2] sm:$0x1]
      %v165 = vlaneseq
      %v166 = vshrl.u32 %v165, 7
      %v167 = vsub.s32 0, %v166
      %v168 = vrot.slane %v163, %v167
      %v170 = vadd.f32 %v161, %v168
      %v171 = vadd.f32 %v162, %v168
      %172 = vst [vmem:[%s3] sm:$0xff] %v170
      %173 = vst [vmem:[%s3 + $0x8] sm:$0xff] %v171
    $region29: #{_forward_impl.1} parent=1 // pred_fallthru
      _
    // Predicated region
    $region30: #{_forward_impl.1} parent=1 // pred_check
      _
    $region31: #{_forward_impl.1} parent=1 // pred_check_branch
      %175 = sbr.rel (0) target = $region33
    $region32: #{_forward_impl.1} parent=1 // pred_region
      _
    $region33: #{_forward_impl.1} parent=1 // pred_fallthru
      _
    // Predicated region
    $region34: #{_forward_impl.1} parent=1 // pred_check
      _
    $region35: #{_forward_impl.1} parent=1 // pred_check_branch
      %177 = sbr.rel (0) target = $region37
    $region36: #{_forward_impl.1} parent=1 // pred_region
      _
    $region37: #{_forward_impl.1} parent=1 // pred_fallthru
      _
    %178 = vsyncpa [#allocation4], 1

</llo_original>
